<compile_context>
chip_gen: v7x
topology: tpu7x:2x2x1
jax: 0.10.0
libtpu: 0.0.40
codegen_flags: <defaults>
</compile_context>

<pallas_src>
import functools

import jax
import jax.numpy as jnp
from jax.experimental import pallas as pl
from jax.experimental.pallas import tpu as pltpu

LANE = 128


def _round_up(n, m):
    return ((n + m - 1) // m) * m


def _pad2d(a, rows, cols):
    r, c = a.shape
    return jnp.pad(a, ((0, rows - r), (0, cols - c)))


def gin_kernel(e1_ref, a_ref, diag_ref, xfull_ref, xrow_ref,
               w1_ref, b1_ref, w2_ref, b2_ref, wc_ref, bc_ref,
               out_ref):
    # ---- neighbor aggregation for this row tile:  A_hat[rows, :] @ X ----
    hu = jnp.dot(a_ref[...], xfull_ref[...],
                 preferred_element_type=jnp.float32)          # (TM, Fp) f32

    # ---- self term:  e1 * diag(A_hat)[rows] * X[rows]  (VPU row scaling) ----
    e1 = e1_ref[0, 0]                                          # SMEM scalar
    h = hu + (e1 * diag_ref[...]) * xrow_ref[...]              # (TM, Fp) f32

    # ---- MLP1 (F -> F/2 -> F/4, ReLU) + classifier head (lane-padded) ----
    h1 = jnp.maximum(
        jnp.dot(h, w1_ref[...], preferred_element_type=jnp.float32)
        + b1_ref[...], 0.0)
    h2 = jnp.maximum(
        jnp.dot(h1, w2_ref[...], preferred_element_type=jnp.float32)
        + b2_ref[...], 0.0)
    out_ref[...] = (jnp.dot(h2, wc_ref[...], preferred_element_type=jnp.float32)
                    + bc_ref[...]).astype(out_ref.dtype)


@functools.partial(jax.jit, static_argnames=("agg_dtype", "tile_m"))
def gin_forward(X, A_hat, e1, W1, b1, W2, b2, Wc, bc,
                *, agg_dtype=jnp.bfloat16, tile_m=None):
    n_nodes, x_size = X.shape
    num_classes = Wc.shape[0]

    # lane-padded feature dims
    fp = _round_up(x_size, LANE)
    h1p = _round_up(x_size // 2, LANE)
    h2p = _round_up(x_size // 4, LANE)
    cp = _round_up(num_classes, LANE)

    # row-tile size: multiple of 8 that divides n_nodes (keeps 2x double-
    # buffered (TM, N) A-tiles small; re-derive per chip for big graphs).
    if tile_m is None:
        tile_m = n_nodes
        for cand in (512, 256, 128, 64, 32, 16, 8):
            if cand <= n_nodes and n_nodes % cand == 0:
                tile_m = cand
                break
    assert n_nodes % tile_m == 0, "tile_m must divide n_nodes"
    grid = (n_nodes // tile_m,)

    # ---- host-side prep (no O(N^2) temporaries besides A_hat itself) ----
    A_hat = A_hat.astype(jnp.float32)
    diag_vec = jnp.diagonal(A_hat).reshape(n_nodes, 1)          # (N, 1) f32
    a_cast = A_hat.astype(agg_dtype)                            # (N, N)

    x_pad = _pad2d(X.astype(jnp.float32), n_nodes, fp)          # (N, Fp) f32
    x_full = x_pad.astype(agg_dtype)                            # contraction copy

    # PyTorch (out, in) weights -> (in, out), zero-padded to 128 lanes
    w1t = _pad2d(W1.astype(jnp.float32).T, fp, h1p)
    w2t = _pad2d(W2.astype(jnp.float32).T, h1p, h2p)
    wct = _pad2d(Wc.astype(jnp.float32).T, h2p, cp)
    b1p = _pad2d(b1.reshape(1, -1).astype(jnp.float32), 1, h1p)
    b2p = _pad2d(b2.reshape(1, -1).astype(jnp.float32), 1, h2p)
    bcp = _pad2d(bc.reshape(1, -1).astype(jnp.float32), 1, cp)

    e1s = e1.reshape(1, 1).astype(jnp.float32)

    out_padded = pl.pallas_call(
        gin_kernel,
        out_shape=jax.ShapeDtypeStruct((n_nodes, cp), jnp.float32),
        grid=grid,
        in_specs=[
            # e1 scalar in SMEM
            pl.BlockSpec((1, 1), lambda i: (0, 0),
                         memory_space=pltpu.MemorySpace.SMEM),
            # A_hat row tile (the only streamed O(N^2) object)
            pl.BlockSpec((tile_m, n_nodes), lambda i: (i, 0)),
            # diag(A_hat) row tile
            pl.BlockSpec((tile_m, 1), lambda i: (i, 0)),
            # full X (contraction operand) -- VMEM-resident across the grid
            pl.BlockSpec((n_nodes, fp), lambda i: (0, 0)),
            # row tile of X (f32) for the self term
            pl.BlockSpec((tile_m, fp), lambda i: (i, 0)),
            # MLP weights / biases: small, VMEM-resident
            pl.BlockSpec((fp, h1p), lambda i: (0, 0)),
            pl.BlockSpec((1, h1p), lambda i: (0, 0)),
            pl.BlockSpec((h1p, h2p), lambda i: (0, 0)),
            pl.BlockSpec((1, h2p), lambda i: (0, 0)),
            pl.BlockSpec((h2p, cp), lambda i: (0, 0)),
            pl.BlockSpec((1, cp), lambda i: (0, 0)),
        ],
        out_specs=pl.BlockSpec((tile_m, cp), lambda i: (i, 0)),
        compiler_params=pltpu.CompilerParams(
            dimension_semantics=("parallel",)),
    )(e1s, a_cast, diag_vec, x_full, x_pad,
      w1t, b1p, w2t, b2p, wct, bcp)

    return out_padded[:, :num_classes]


def gin_reference(X, A_hat, e1, W1, b1, W2, b2, Wc, bc):
    diag_A = jnp.diag(jnp.diagonal(A_hat))
    off_diag = A_hat - diag_A
    hv = diag_A @ X
    hu = off_diag @ X
    H = (1.0 + e1[0, 0]) * hv + hu
    H = jax.nn.relu(H @ W1.T + b1)
    H = jax.nn.relu(H @ W2.T + b2)
    return H @ Wc.T + bc


if __name__ == "__main__":
    n_nodes = 16        # graph with 16 nodes
    X_size = 32         # node feature size (hidden 32 -> 16 -> 8)
    num_classes = 4

    key = jax.random.PRNGKey(0)
    ks = jax.random.split(key, 10)

    X = jax.random.normal(ks[0], (n_nodes, X_size), dtype=jnp.float32)
    A_hat = jax.random.uniform(ks[1], (n_nodes, n_nodes), dtype=jnp.float32)

    e1 = jax.random.normal(ks[2], (1, 1), dtype=jnp.float32)
    W1 = jax.random.normal(ks[3], (X_size // 2, X_size), jnp.float32) * 0.1
    b1 = jax.random.normal(ks[4], (X_size // 2,), jnp.float32) * 0.1
    W2 = jax.random.normal(ks[5], (X_size // 4, X_size // 2), jnp.float32) * 0.1
    b2 = jax.random.normal(ks[6], (X_size // 4,), jnp.float32) * 0.1
    Wc = jax.random.normal(ks[7], (num_classes, X_size // 4), jnp.float32) * 0.1
    bc = jax.random.normal(ks[8], (num_classes,), jnp.float32) * 0.1

    ref = gin_reference(X, A_hat, e1, W1, b1, W2, b2, Wc, bc)

    # f32 aggregation path (exercises the 2-step row grid): tight check
    out_f32 = gin_forward(X, A_hat, e1, W1, b1, W2, b2, Wc, bc,
                          agg_dtype=jnp.float32, tile_m=8)
    out_f32 = jax.block_until_ready(out_f32)
    assert out_f32.shape == (n_nodes, num_classes)
    assert jnp.allclose(out_f32, ref, atol=1e-4, rtol=1e-4)

    # bf16 aggregation path (v6e/v7x MXU / HBM-bytes optimization): loose check
    out_bf16 = gin_forward(X, A_hat, e1, W1, b1, W2, b2, Wc, bc,
                           agg_dtype=jnp.bfloat16, tile_m=8)
    out_bf16 = jax.block_until_ready(out_bf16)
    assert out_bf16.shape == (n_nodes, num_classes)
    assert jnp.allclose(out_bf16, ref, atol=5e-2, rtol=5e-2)

    print("KERNEL_OK")
</pallas_src>

<mosaic_0001>
module attributes {stable_mosaic.version = 11 : i64} {
  func.func @gin_kernel(%arg0: i32, %arg1: memref<1x1xf32, #tpu.memory_space<smem>>, %arg2: memref<8x16xf32, #tpu.memory_space<vmem>>, %arg3: memref<8x1xf32, #tpu.memory_space<vmem>>, %arg4: memref<16x128xf32, #tpu.memory_space<vmem>>, %arg5: memref<8x128xf32, #tpu.memory_space<vmem>>, %arg6: memref<128x128xf32, #tpu.memory_space<vmem>>, %arg7: memref<1x128xf32, #tpu.memory_space<vmem>>, %arg8: memref<128x128xf32, #tpu.memory_space<vmem>>, %arg9: memref<1x128xf32, #tpu.memory_space<vmem>>, %arg10: memref<128x128xf32, #tpu.memory_space<vmem>>, %arg11: memref<1x128xf32, #tpu.memory_space<vmem>>, %arg12: memref<8x128xf32, #tpu.memory_space<vmem>>) attributes {dimension_semantics = [#tpu.dimension_semantics<parallel>], iteration_bounds = array<i64: 2>, scalar_prefetch = 0 : i64, scratch_operands = 0 : i64, tpu.core_type = #tpu.core_type<tc>, window_params = [{transform_indices = @transform_0, window_bounds = array<i64: 1, 1>}, {transform_indices = @transform_1, window_bounds = array<i64: 8, 16>}, {transform_indices = @transform_2, window_bounds = array<i64: 8, 1>}, {pipeline_mode = #tpu.pipeline_mode<synchronous>, transform_indices = @transform_3, window_bounds = array<i64: 16, 128>}, {transform_indices = @transform_4, window_bounds = array<i64: 8, 128>}, {pipeline_mode = #tpu.pipeline_mode<synchronous>, transform_indices = @transform_5, window_bounds = array<i64: 128, 128>}, {pipeline_mode = #tpu.pipeline_mode<synchronous>, transform_indices = @transform_6, window_bounds = array<i64: 1, 128>}, {pipeline_mode = #tpu.pipeline_mode<synchronous>, transform_indices = @transform_7, window_bounds = array<i64: 128, 128>}, {pipeline_mode = #tpu.pipeline_mode<synchronous>, transform_indices = @transform_8, window_bounds = array<i64: 1, 128>}, {pipeline_mode = #tpu.pipeline_mode<synchronous>, transform_indices = @transform_9, window_bounds = array<i64: 128, 128>}, {pipeline_mode = #tpu.pipeline_mode<synchronous>, transform_indices = @transform_10, window_bounds = array<i64: 1, 128>}, {transform_indices = @transform_11, window_bounds = array<i64: 8, 128>}]} {
    %c0 = arith.constant 0 : index
    %c0_0 = arith.constant 0 : index
    %0 = vector.load %arg2[%c0, %c0_0] : memref<8x16xf32, #tpu.memory_space<vmem>>, vector<8x16xf32>
    %c0_1 = arith.constant 0 : index
    %c0_2 = arith.constant 0 : index
    %1 = vector.load %arg4[%c0_1, %c0_2] : memref<16x128xf32, #tpu.memory_space<vmem>>, vector<16x128xf32>
    %cst = arith.constant dense<0.000000e+00> : vector<8x128xf32>
    %2 = tpu.matmul %0, %1, %cst {dimension_numbers = #tpu.dot_dimension_numbers<[1], [0], [0], [1], [0, 0, 1, 1], [], []>} : vector<8x16xf32>, vector<16x128xf32>, vector<8x128xf32> -> vector<8x128xf32>
    %c0_3 = arith.constant 0 : index
    %c0_4 = arith.constant 0 : index
    %3 = memref.load %arg1[%c0_3, %c0_4] : memref<1x1xf32, #tpu.memory_space<smem>>
    %c0_5 = arith.constant 0 : index
    %c0_6 = arith.constant 0 : index
    %4 = vector.load %arg3[%c0_5, %c0_6] : memref<8x1xf32, #tpu.memory_space<vmem>>, vector<8x1xf32>
    %5 = vector.broadcast %3 : f32 to vector<8x1xf32>
    %6 = arith.mulf %5, %4 : vector<8x1xf32>
    %c0_7 = arith.constant 0 : index
    %c0_8 = arith.constant 0 : index
    %7 = vector.load %arg5[%c0_7, %c0_8] : memref<8x128xf32, #tpu.memory_space<vmem>>, vector<8x128xf32>
    %8 = vector.broadcast %6 : vector<8x1xf32> to vector<8x128xf32>
    %9 = arith.mulf %8, %7 : vector<8x128xf32>
    %10 = arith.addf %2, %9 : vector<8x128xf32>
    %c0_9 = arith.constant 0 : index
    %c0_10 = arith.constant 0 : index
    %11 = vector.load %arg6[%c0_9, %c0_10] : memref<128x128xf32, #tpu.memory_space<vmem>>, vector<128x128xf32>
    %cst_11 = arith.constant dense<0.000000e+00> : vector<8x128xf32>
    %12 = tpu.matmul %10, %11, %cst_11 {dimension_numbers = #tpu.dot_dimension_numbers<[1], [0], [0], [1], [0, 0, 1, 1], [], []>} : vector<8x128xf32>, vector<128x128xf32>, vector<8x128xf32> -> vector<8x128xf32>
    %c0_12 = arith.constant 0 : index
    %c0_13 = arith.constant 0 : index
    %13 = vector.load %arg7[%c0_12, %c0_13] : memref<1x128xf32, #tpu.memory_space<vmem>>, vector<1x128xf32>
    %14 = vector.broadcast %13 : vector<1x128xf32> to vector<8x128xf32>
    %15 = arith.addf %12, %14 : vector<8x128xf32>
    %cst_14 = arith.constant 0.000000e+00 : f32
    %16 = vector.broadcast %cst_14 : f32 to vector<8x128xf32>
    %17 = arith.maximumf %15, %16 : vector<8x128xf32>
    %c0_15 = arith.constant 0 : index
    %c0_16 = arith.constant 0 : index
    %18 = vector.load %arg8[%c0_15, %c0_16] : memref<128x128xf32, #tpu.memory_space<vmem>>, vector<128x128xf32>
    %cst_17 = arith.constant dense<0.000000e+00> : vector<8x128xf32>
    %19 = tpu.matmul %17, %18, %cst_17 {dimension_numbers = #tpu.dot_dimension_numbers<[1], [0], [0], [1], [0, 0, 1, 1], [], []>} : vector<8x128xf32>, vector<128x128xf32>, vector<8x128xf32> -> vector<8x128xf32>
    %c0_18 = arith.constant 0 : index
    %c0_19 = arith.constant 0 : index
    %20 = vector.load %arg9[%c0_18, %c0_19] : memref<1x128xf32, #tpu.memory_space<vmem>>, vector<1x128xf32>
    %21 = vector.broadcast %20 : vector<1x128xf32> to vector<8x128xf32>
    %22 = arith.addf %19, %21 : vector<8x128xf32>
    %cst_20 = arith.constant 0.000000e+00 : f32
    %23 = vector.broadcast %cst_20 : f32 to vector<8x128xf32>
    %24 = arith.maximumf %22, %23 : vector<8x128xf32>
    %c0_21 = arith.constant 0 : index
    %c0_22 = arith.constant 0 : index
    %25 = vector.load %arg10[%c0_21, %c0_22] : memref<128x128xf32, #tpu.memory_space<vmem>>, vector<128x128xf32>
    %cst_23 = arith.constant dense<0.000000e+00> : vector<8x128xf32>
    %26 = tpu.matmul %24, %25, %cst_23 {dimension_numbers = #tpu.dot_dimension_numbers<[1], [0], [0], [1], [0, 0, 1, 1], [], []>} : vector<8x128xf32>, vector<128x128xf32>, vector<8x128xf32> -> vector<8x128xf32>
    %c0_24 = arith.constant 0 : index
    %c0_25 = arith.constant 0 : index
    %27 = vector.load %arg11[%c0_24, %c0_25] : memref<1x128xf32, #tpu.memory_space<vmem>>, vector<1x128xf32>
    %28 = vector.broadcast %27 : vector<1x128xf32> to vector<8x128xf32>
    %29 = arith.addf %26, %28 : vector<8x128xf32>
    %c0_26 = arith.constant 0 : index
    %c0_27 = arith.constant 0 : index
    %30 = vector.load %arg12[%c0_26, %c0_27] : memref<8x128xf32, #tpu.memory_space<vmem>>, vector<8x128xf32>
    tpu.vector_store %arg12[%c0_26, %c0_27], %29 {strides = array<i32>} : memref<8x128xf32, #tpu.memory_space<vmem>>, vector<8x128xf32>,
    return
  }
  func.func @transform_0(%arg0: i32) -> (i32, i32) {
    %c0_i32 = arith.constant 0 : i32
    %c0_i32_0 = arith.constant 0 : i32
    %c0_i32_1 = arith.constant 0 : i32
    return %c0_i32, %c0_i32_0 : i32, i32
  }
  func.func @transform_1(%arg0: i32) -> (i32, i32) {
    %c0_i32 = arith.constant 0 : i32
    %c0_i32_0 = arith.constant 0 : i32
    return %arg0, %c0_i32 : i32, i32
  }
  func.func @transform_2(%arg0: i32) -> (i32, i32) {
    %c0_i32 = arith.constant 0 : i32
    %c0_i32_0 = arith.constant 0 : i32
    return %arg0, %c0_i32 : i32, i32
  }
  func.func @transform_3(%arg0: i32) -> (i32, i32) {
    %c0_i32 = arith.constant 0 : i32
    %c0_i32_0 = arith.constant 0 : i32
    %c0_i32_1 = arith.constant 0 : i32
    return %c0_i32, %c0_i32_0 : i32, i32
  }
  func.func @transform_4(%arg0: i32) -> (i32, i32) {
    %c0_i32 = arith.constant 0 : i32
    %c0_i32_0 = arith.constant 0 : i32
    return %arg0, %c0_i32 : i32, i32
  }
  func.func @transform_5(%arg0: i32) -> (i32, i32) {
    %c0_i32 = arith.constant 0 : i32
    %c0_i32_0 = arith.constant 0 : i32
    %c0_i32_1 = arith.constant 0 : i32
    return %c0_i32, %c0_i32_0 : i32, i32
  }
  func.func @transform_6(%arg0: i32) -> (i32, i32) {
    %c0_i32 = arith.constant 0 : i32
    %c0_i32_0 = arith.constant 0 : i32
    %c0_i32_1 = arith.constant 0 : i32
    return %c0_i32, %c0_i32_0 : i32, i32
  }
  func.func @transform_7(%arg0: i32) -> (i32, i32) {
    %c0_i32 = arith.constant 0 : i32
    %c0_i32_0 = arith.constant 0 : i32
    %c0_i32_1 = arith.constant 0 : i32
    return %c0_i32, %c0_i32_0 : i32, i32
  }
  func.func @transform_8(%arg0: i32) -> (i32, i32) {
    %c0_i32 = arith.constant 0 : i32
    %c0_i32_0 = arith.constant 0 : i32
    %c0_i32_1 = arith.constant 0 : i32
    return %c0_i32, %c0_i32_0 : i32, i32
  }
  func.func @transform_9(%arg0: i32) -> (i32, i32) {
    %c0_i32 = arith.constant 0 : i32
    %c0_i32_0 = arith.constant 0 : i32
    %c0_i32_1 = arith.constant 0 : i32
    return %c0_i32, %c0_i32_0 : i32, i32
  }
  func.func @transform_10(%arg0: i32) -> (i32, i32) {
    %c0_i32 = arith.constant 0 : i32
    %c0_i32_0 = arith.constant 0 : i32
    %c0_i32_1 = arith.constant 0 : i32
    return %c0_i32, %c0_i32_0 : i32, i32
  }
  func.func @transform_11(%arg0: i32) -> (i32, i32) {
    %c0_i32 = arith.constant 0 : i32
    %c0_i32_0 = arith.constant 0 : i32
    return %arg0, %c0_i32 : i32, i32
  }
}

</mosaic_0001>

<llo_original>
// kernel: gin_forward.1
$region0: #{gin_forward.1}
  #allocation0 [shape = 'u32[]', space=smem, size = 0x4, offset = 0x4, fixed_abs, tag = 'smem constant byte address 0x4 - core index']
  #allocation1 [shape = 'u32[144,128]{1,0:T(1,128)}', space=vmem, size = 0x12000, scoped, tag = 'internal scratch']
  #allocation2 [shape = 'f32[1,1]{1,0:T(1,128)S(6)}', space=smem, size = 0x200, scoped, tag = 'scoped memory for gin_forward.1']
  %s0 = inlined_call_operand.<no memory space> [shape: f32[1,1], index: 0, kind: input, shape index: {}]
  %s1 = inlined_call_operand.vmem [shape: f32[16,16], index: 1, kind: input, shape index: {}]
  %s2 = inlined_call_operand.vmem [shape: f32[16,1], index: 2, kind: input, shape index: {}]
  %s3 = inlined_call_operand.vmem [shape: f32[16,128], index: 3, kind: input, shape index: {}, may-alias: {3,4}]
  %s4 = inlined_call_operand.vmem [shape: f32[16,128], index: 4, kind: input, shape index: {}, may-alias: {3,4}]
  %s5 = inlined_call_operand.vmem [shape: f32[128,128], index: 5, kind: input, shape index: {}]
  %s6 = inlined_call_operand.vmem [shape: f32[1,128], index: 6, kind: input, shape index: {}]
  %s7 = inlined_call_operand.vmem [shape: f32[128,128], index: 7, kind: input, shape index: {}]
  %s8 = inlined_call_operand.vmem [shape: f32[1,128], index: 8, kind: input, shape index: {}]
  %s9 = inlined_call_operand.vmem [shape: f32[128,128], index: 9, kind: input, shape index: {}]
  %s10 = inlined_call_operand.vmem [shape: f32[1,128], index: 10, kind: input, shape index: {}]
  %s11 = inlined_call_operand.vmem [shape: f32[16,128], index: 11, kind: output, shape index: {}]
  %s12 = sld [smem:[#allocation0]]
  $region77: #{gin_forward.1} parent=0
    _
  %s14 = ssub.s32 1, %s12
  %s15 = scalar_select 0, %s14, %s12
  %16 = sst [smem:[#allocation2]] %s0
  loop: start=0, step=1, limit=4
  $region2: #{gin_forward.1} parent=0 // loop_pre_header
    _
  $region3: #{gin_forward.1} parent=0 // loop_header
    %s18 = sphi 0, %s22
    %p19 = scmp.ge.s32.totalorder %s18, 4
    %s26 = sphi 0, %s26
    %s28 = sphi 0, %s26
    %s29 = sphi 0, %s28
    %s43 = sphi 0, %s29
    %s49 = sphi 0, %s51
    %s52 = sphi 0, %s49
    %s53 = sphi 0, %s52
    %s69 = sphi 0, %s53
    %s75 = sphi 0, %s77
    %s78 = sphi 0, %s75
    %s79 = sphi 0, %s78
    %s95 = sphi 0, %s79
    %s99 = sphi 0, %s99
    %s101 = sphi 0, %s99
    %s102 = sphi 0, %s101
    %s116 = sphi 0, %s102
    %s122 = sphi 0, %s124
    %s125 = sphi 0, %s122
    %s126 = sphi 0, %s125
    %s142 = sphi 0, %s126
    %s146 = sphi 0, %s146
    %s148 = sphi 0, %s146
    %s149 = sphi 0, %s148
    %s163 = sphi 0, %s149
    %s167 = sphi 0, %s167
    %s169 = sphi 0, %s167
    %s170 = sphi 0, %s169
    %s184 = sphi 0, %s170
    %s188 = sphi 0, %s188
    %s190 = sphi 0, %s188
    %s191 = sphi 0, %s190
    %s205 = sphi 0, %s191
    %s209 = sphi 0, %s209
    %s211 = sphi 0, %s209
    %s212 = sphi 0, %s211
    %s226 = sphi 0, %s212
    %s230 = sphi 0, %s230
    %s232 = sphi 0, %s230
    %s233 = sphi 0, %s232
    %s247 = sphi 0, %s233
    %s251 = sphi 0, %s251
    %s253 = sphi 0, %s251
    %s254 = sphi 0, %s253
    %s268 = sphi 0, %s254
    %s274 = sphi 0, %s276
    %s277 = sphi 0, %s274
    %s278 = sphi 0, %s277
    %s294 = sphi 0, %s278
  $region4: #{gin_forward.1} parent=0 // loop_header_branch
    %21 = sbr.rel (%p19) target = $region8
  $region5: #{gin_forward.1} parent=0 // loop_body
    %s23 = ssub.s32 %s18, 1
    %s24 = ssub.s32 %s18, 2
    %s25 = sadd.s32 %s18, 1
    %s27 = sadd.s32 %s26, 1
    %p30 = scmp.eq.s32.totalorder %s18, 1
    %p31 = scmp.ne.s32.totalorder %s26, %s28
    %p32 = scmp.eq.s32.totalorder %s18, 0
    %p33 = por %p31, %p32
    %p34 = scmp.ne.s32.totalorder %s26, %s28
    %p35 = scmp.eq.s32.totalorder %s23, 1
    %p36 = por %p34, %p35
    %p37 = scmp.ne.s32.totalorder %s28, %s29
    %p38 = scmp.eq.s32.totalorder %s23, 0
    %p39 = por %p37, %p38
    %p40 = scmp.ne.s32.totalorder %s28, %s29
    %p41 = scmp.eq.s32.totalorder %s24, 1
    %p42 = por %p40, %p41
    %p44 = scmp.ne.s32.totalorder %s29, %s43
    %p45 = scmp.eq.s32.totalorder %s24, 0
    %p46 = por %p44, %p45
    %s47 = ssub.s32 %s18, %s25
    %p48 = scmp.eq.s32.totalorder %s47, 0
    %s50 = sadd.s32 %s49, 1
    %s51 = scalar_select %p48, %s49, %s50
    %p54 = pneg %p48
    %p55 = scmp.eq.s32.totalorder %s18, 1
    %p56 = por %p54, %p55
    %p57 = scmp.ne.s32.totalorder %s49, %s52
    %p58 = scmp.eq.s32.totalorder %s18, 0
    %p59 = por %p57, %p58
    %p60 = scmp.ne.s32.totalorder %s49, %s52
    %p61 = scmp.eq.s32.totalorder %s23, 1
    %p62 = por %p60, %p61
    %p63 = scmp.ne.s32.totalorder %s52, %s53
    %p64 = scmp.eq.s32.totalorder %s23, 0
    %p65 = por %p63, %p64
    %p66 = scmp.ne.s32.totalorder %s52, %s53
    %p67 = scmp.eq.s32.totalorder %s24, 1
    %p68 = por %p66, %p67
    %p70 = scmp.ne.s32.totalorder %s53, %s69
    %p71 = scmp.eq.s32.totalorder %s24, 0
    %p72 = por %p70, %p71
    %s73 = ssub.s32 %s18, %s25
    %p74 = scmp.eq.s32.totalorder %s73, 0
    %s76 = sadd.s32 %s75, 1
    %s77 = scalar_select %p74, %s75, %s76
    %p80 = pneg %p74
    %p81 = scmp.eq.s32.totalorder %s18, 1
    %p82 = por %p80, %p81
    %p83 = scmp.ne.s32.totalorder %s75, %s78
    %p84 = scmp.eq.s32.totalorder %s18, 0
    %p85 = por %p83, %p84
    %p86 = scmp.ne.s32.totalorder %s75, %s78
    %p87 = scmp.eq.s32.totalorder %s23, 1
    %p88 = por %p86, %p87
    %p89 = scmp.ne.s32.totalorder %s78, %s79
    %p90 = scmp.eq.s32.totalorder %s23, 0
    %p91 = por %p89, %p90
    %p92 = scmp.ne.s32.totalorder %s78, %s79
    %p93 = scmp.eq.s32.totalorder %s24, 1
    %p94 = por %p92, %p93
    %p96 = scmp.ne.s32.totalorder %s79, %s95
    %p97 = scmp.eq.s32.totalorder %s24, 0
    %p98 = por %p96, %p97
    %s100 = sadd.s32 %s99, 1
    %p103 = scmp.eq.s32.totalorder %s18, 1
    %p104 = scmp.ne.s32.totalorder %s99, %s101
    %p105 = scmp.eq.s32.totalorder %s18, 0
    %p106 = por %p104, %p105
    %p107 = scmp.ne.s32.totalorder %s99, %s101
    %p108 = scmp.eq.s32.totalorder %s23, 1
    %p109 = por %p107, %p108
    %p110 = scmp.ne.s32.totalorder %s101, %s102
    %p111 = scmp.eq.s32.totalorder %s23, 0
    %p112 = por %p110, %p111
    %p113 = scmp.ne.s32.totalorder %s101, %s102
    %p114 = scmp.eq.s32.totalorder %s24, 1
    %p115 = por %p113, %p114
    %p117 = scmp.ne.s32.totalorder %s102, %s116
    %p118 = scmp.eq.s32.totalorder %s24, 0
    %p119 = por %p117, %p118
    %s120 = ssub.s32 %s18, %s25
    %p121 = scmp.eq.s32.totalorder %s120, 0
    %s123 = sadd.s32 %s122, 1
    %s124 = scalar_select %p121, %s122, %s123
    %p127 = pneg %p121
    %p128 = scmp.eq.s32.totalorder %s18, 1
    %p129 = por %p127, %p128
    %p130 = scmp.ne.s32.totalorder %s122, %s125
    %p131 = scmp.eq.s32.totalorder %s18, 0
    %p132 = por %p130, %p131
    %p133 = scmp.ne.s32.totalorder %s122, %s125
    %p134 = scmp.eq.s32.totalorder %s23, 1
    %p135 = por %p133, %p134
    %p136 = scmp.ne.s32.totalorder %s125, %s126
    %p137 = scmp.eq.s32.totalorder %s23, 0
    %p138 = por %p136, %p137
    %p139 = scmp.ne.s32.totalorder %s125, %s126
    %p140 = scmp.eq.s32.totalorder %s24, 1
    %p141 = por %p139, %p140
    %p143 = scmp.ne.s32.totalorder %s126, %s142
    %p144 = scmp.eq.s32.totalorder %s24, 0
    %p145 = por %p143, %p144
    %s147 = sadd.s32 %s146, 1
    %p150 = scmp.eq.s32.totalorder %s18, 1
    %p151 = scmp.ne.s32.totalorder %s146, %s148
    %p152 = scmp.eq.s32.totalorder %s18, 0
    %p153 = por %p151, %p152
    %p154 = scmp.ne.s32.totalorder %s146, %s148
    %p155 = scmp.eq.s32.totalorder %s23, 1
    %p156 = por %p154, %p155
    %p157 = scmp.ne.s32.totalorder %s148, %s149
    %p158 = scmp.eq.s32.totalorder %s23, 0
    %p159 = por %p157, %p158
    %p160 = scmp.ne.s32.totalorder %s148, %s149
    %p161 = scmp.eq.s32.totalorder %s24, 1
    %p162 = por %p160, %p161
    %p164 = scmp.ne.s32.totalorder %s149, %s163
    %p165 = scmp.eq.s32.totalorder %s24, 0
    %p166 = por %p164, %p165
    %s168 = sadd.s32 %s167, 1
    %p171 = scmp.eq.s32.totalorder %s18, 1
    %p172 = scmp.ne.s32.totalorder %s167, %s169
    %p173 = scmp.eq.s32.totalorder %s18, 0
    %p174 = por %p172, %p173
    %p175 = scmp.ne.s32.totalorder %s167, %s169
    %p176 = scmp.eq.s32.totalorder %s23, 1
    %p177 = por %p175, %p176
    %p178 = scmp.ne.s32.totalorder %s169, %s170
    %p179 = scmp.eq.s32.totalorder %s23, 0
    %p180 = por %p178, %p179
    %p181 = scmp.ne.s32.totalorder %s169, %s170
    %p182 = scmp.eq.s32.totalorder %s24, 1
    %p183 = por %p181, %p182
    %p185 = scmp.ne.s32.totalorder %s170, %s184
    %p186 = scmp.eq.s32.totalorder %s24, 0
    %p187 = por %p185, %p186
    %s189 = sadd.s32 %s188, 1
    %p192 = scmp.eq.s32.totalorder %s18, 1
    %p193 = scmp.ne.s32.totalorder %s188, %s190
    %p194 = scmp.eq.s32.totalorder %s18, 0
    %p195 = por %p193, %p194
    %p196 = scmp.ne.s32.totalorder %s188, %s190
    %p197 = scmp.eq.s32.totalorder %s23, 1
    %p198 = por %p196, %p197
    %p199 = scmp.ne.s32.totalorder %s190, %s191
    %p200 = scmp.eq.s32.totalorder %s23, 0
    %p201 = por %p199, %p200
    %p202 = scmp.ne.s32.totalorder %s190, %s191
    %p203 = scmp.eq.s32.totalorder %s24, 1
    %p204 = por %p202, %p203
    %p206 = scmp.ne.s32.totalorder %s191, %s205
    %p207 = scmp.eq.s32.totalorder %s24, 0
    %p208 = por %p206, %p207
    %s210 = sadd.s32 %s209, 1
    %p213 = scmp.eq.s32.totalorder %s18, 1
    %p214 = scmp.ne.s32.totalorder %s209, %s211
    %p215 = scmp.eq.s32.totalorder %s18, 0
    %p216 = por %p214, %p215
    %p217 = scmp.ne.s32.totalorder %s209, %s211
    %p218 = scmp.eq.s32.totalorder %s23, 1
    %p219 = por %p217, %p218
    %p220 = scmp.ne.s32.totalorder %s211, %s212
    %p221 = scmp.eq.s32.totalorder %s23, 0
    %p222 = por %p220, %p221
    %p223 = scmp.ne.s32.totalorder %s211, %s212
    %p224 = scmp.eq.s32.totalorder %s24, 1
    %p225 = por %p223, %p224
    %p227 = scmp.ne.s32.totalorder %s212, %s226
    %p228 = scmp.eq.s32.totalorder %s24, 0
    %p229 = por %p227, %p228
    %s231 = sadd.s32 %s230, 1
    %p234 = scmp.eq.s32.totalorder %s18, 1
    %p235 = scmp.ne.s32.totalorder %s230, %s232
    %p236 = scmp.eq.s32.totalorder %s18, 0
    %p237 = por %p235, %p236
    %p238 = scmp.ne.s32.totalorder %s230, %s232
    %p239 = scmp.eq.s32.totalorder %s23, 1
    %p240 = por %p238, %p239
    %p241 = scmp.ne.s32.totalorder %s232, %s233
    %p242 = scmp.eq.s32.totalorder %s23, 0
    %p243 = por %p241, %p242
    %p244 = scmp.ne.s32.totalorder %s232, %s233
    %p245 = scmp.eq.s32.totalorder %s24, 1
    %p246 = por %p244, %p245
    %p248 = scmp.ne.s32.totalorder %s233, %s247
    %p249 = scmp.eq.s32.totalorder %s24, 0
    %p250 = por %p248, %p249
    %s252 = sadd.s32 %s251, 1
    %p255 = scmp.eq.s32.totalorder %s18, 1
    %p256 = scmp.ne.s32.totalorder %s251, %s253
    %p257 = scmp.eq.s32.totalorder %s18, 0
    %p258 = por %p256, %p257
    %p259 = scmp.ne.s32.totalorder %s251, %s253
    %p260 = scmp.eq.s32.totalorder %s23, 1
    %p261 = por %p259, %p260
    %p262 = scmp.ne.s32.totalorder %s253, %s254
    %p263 = scmp.eq.s32.totalorder %s23, 0
    %p264 = por %p262, %p263
    %p265 = scmp.ne.s32.totalorder %s253, %s254
    %p266 = scmp.eq.s32.totalorder %s24, 1
    %p267 = por %p265, %p266
    %p269 = scmp.ne.s32.totalorder %s254, %s268
    %p270 = scmp.eq.s32.totalorder %s24, 0
    %p271 = por %p269, %p270
    %s272 = ssub.s32 %s18, %s25
    %p273 = scmp.eq.s32.totalorder %s272, 0
    %s275 = sadd.s32 %s274, 1
    %s276 = scalar_select %p273, %s274, %s275
    %p279 = pneg %p273
    %p280 = scmp.eq.s32.totalorder %s18, 1
    %p281 = por %p279, %p280
    %p282 = scmp.ne.s32.totalorder %s274, %s277
    %p283 = scmp.eq.s32.totalorder %s18, 0
    %p284 = por %p282, %p283
    %p285 = scmp.ne.s32.totalorder %s274, %s277
    %p286 = scmp.eq.s32.totalorder %s23, 1
    %p287 = por %p285, %p286
    %p288 = scmp.ne.s32.totalorder %s277, %s278
    %p289 = scmp.eq.s32.totalorder %s23, 0
    %p290 = por %p288, %p289
    %p291 = scmp.ne.s32.totalorder %s277, %s278
    %p292 = scmp.eq.s32.totalorder %s24, 1
    %p293 = por %p291, %p292
    %p295 = scmp.ne.s32.totalorder %s278, %s294
    %p296 = scmp.eq.s32.totalorder %s24, 0
    %p297 = por %p295, %p296
    %p298 = scmp.le.s32.totalorder 1, %s18
    %p299 = scmp.lt.s32.totalorder %s18, 3
    %p300 = pnand %p298, %p299
    %p301 = pneg %p300
    // Predicated region
    $region9: #{gin_forward.1} parent=5 // pred_check
      _
    $region10: #{gin_forward.1} parent=5 // pred_check_branch
      %303 = sbr.rel (%p300) target = $region12
    $region11: #{gin_forward.1} parent=5 // pred_region
      %s304 = ssub.s32 %s18, 1
      // Predicated region
      $region13: #{gin_forward.1} parent=11 // pred_check
        %p305 = pneg %p39
      $region14: #{gin_forward.1} parent=11 // pred_check_branch
        %307 = sbr.rel (%p305) target = $region16
      $region15: #{gin_forward.1} parent=11 // pred_region
        _
      $region16: #{gin_forward.1} parent=11 // pred_fallthru
        _
      // Predicated region
      $region17: #{gin_forward.1} parent=11 // pred_check
        %p308 = pneg %p112
      $region18: #{gin_forward.1} parent=11 // pred_check_branch
        %310 = sbr.rel (%p308) target = $region20
      $region19: #{gin_forward.1} parent=11 // pred_region
        _
      $region20: #{gin_forward.1} parent=11 // pred_fallthru
        _
      // Predicated region
      $region21: #{gin_forward.1} parent=11 // pred_check
        %p311 = pneg %p159
      $region22: #{gin_forward.1} parent=11 // pred_check_branch
        %313 = sbr.rel (%p311) target = $region24
      $region23: #{gin_forward.1} parent=11 // pred_region
        _
      $region24: #{gin_forward.1} parent=11 // pred_fallthru
        _
      // Predicated region
      $region25: #{gin_forward.1} parent=11 // pred_check
        %p314 = pneg %p180
      $region26: #{gin_forward.1} parent=11 // pred_check_branch
        %316 = sbr.rel (%p314) target = $region28
      $region27: #{gin_forward.1} parent=11 // pred_region
        _
      $region28: #{gin_forward.1} parent=11 // pred_fallthru
        _
      // Predicated region
      $region29: #{gin_forward.1} parent=11 // pred_check
        %p317 = pneg %p201
      $region30: #{gin_forward.1} parent=11 // pred_check_branch
        %319 = sbr.rel (%p317) target = $region32
      $region31: #{gin_forward.1} parent=11 // pred_region
        _
      $region32: #{gin_forward.1} parent=11 // pred_fallthru
        _
      // Predicated region
      $region33: #{gin_forward.1} parent=11 // pred_check
        %p320 = pneg %p222
      $region34: #{gin_forward.1} parent=11 // pred_check_branch
        %322 = sbr.rel (%p320) target = $region36
      $region35: #{gin_forward.1} parent=11 // pred_region
        _
      $region36: #{gin_forward.1} parent=11 // pred_fallthru
        _
      // Predicated region
      $region37: #{gin_forward.1} parent=11 // pred_check
        %p323 = pneg %p243
      $region38: #{gin_forward.1} parent=11 // pred_check_branch
        %325 = sbr.rel (%p323) target = $region40
      $region39: #{gin_forward.1} parent=11 // pred_region
        _
      $region40: #{gin_forward.1} parent=11 // pred_fallthru
        _
      // Predicated region
      $region41: #{gin_forward.1} parent=11 // pred_check
        %p326 = pneg %p264
      $region42: #{gin_forward.1} parent=11 // pred_check_branch
        %328 = sbr.rel (%p326) target = $region44
      $region43: #{gin_forward.1} parent=11 // pred_region
        _
      $region44: #{gin_forward.1} parent=11 // pred_fallthru
        _
    $region12: #{gin_forward.1} parent=5 // pred_fallthru
      _
    %p329 = scmp.lt.s32.totalorder %s18, 2
    // Predicated region
    $region45: #{gin_forward.1} parent=5 // pred_check
      %p330 = pneg %p329
    $region46: #{gin_forward.1} parent=5 // pred_check_branch
      %332 = sbr.rel (%p330) target = $region48
    $region47: #{gin_forward.1} parent=5 // pred_region
      // Predicated region
      $region49: #{gin_forward.1} parent=47 // pred_check
        %p333 = pneg %p59
      $region50: #{gin_forward.1} parent=47 // pred_check_branch
        %335 = sbr.rel (%p333) target = $region52
      $region51: #{gin_forward.1} parent=47 // pred_region
        %p336 = scmp.lt.s32.totalorder %s18, 1
        %s337 = scalar_select %p336, %s18, 1
        %s338 = smul.addr %s337, 8
        %s339 = scalar_lea.vmem %s1, %s338
      $region52: #{gin_forward.1} parent=47 // pred_fallthru
        _
      // Predicated region
      $region53: #{gin_forward.1} parent=47 // pred_check
        %p340 = pneg %p85
      $region54: #{gin_forward.1} parent=47 // pred_check_branch
        %342 = sbr.rel (%p340) target = $region56
      $region55: #{gin_forward.1} parent=47 // pred_region
        %p343 = scmp.lt.s32.totalorder %s18, 1
        %s344 = scalar_select %p343, %s18, 1
        %s345 = smul.addr %s344, 8
        %s346 = scalar_lea.vmem %s2, %s345
      $region56: #{gin_forward.1} parent=47 // pred_fallthru
        _
      // Predicated region
      $region57: #{gin_forward.1} parent=47 // pred_check
        %p347 = pneg %p132
      $region58: #{gin_forward.1} parent=47 // pred_check_branch
        %349 = sbr.rel (%p347) target = $region60
      $region59: #{gin_forward.1} parent=47 // pred_region
        %p350 = scmp.lt.s32.totalorder %s18, 1
        %s351 = scalar_select %p350, %s18, 1
        %s352 = smul.addr %s351, 8
        %s353 = scalar_lea.vmem %s4, %s352
      $region60: #{gin_forward.1} parent=47 // pred_fallthru
        _
    $region48: #{gin_forward.1} parent=5 // pred_fallthru
      _
    %p354 = scmp.le.s32.totalorder 1, %s18
    %p355 = scmp.lt.s32.totalorder %s18, 3
    %p356 = pnand %p354, %p355
    %p357 = pneg %p356
    // Predicated region
    $region61: #{gin_forward.1} parent=5 // pred_check
      _
    $region62: #{gin_forward.1} parent=5 // pred_check_branch
      %359 = sbr.rel (%p356) target = $region64
    $region63: #{gin_forward.1} parent=5 // pred_region
      %s360 = ssub.s32 %s18, 1
      %p361 = pneg %p39
      %p362 = pneg %p36
      %p363 = scmp.lt.s32.totalorder %s23, 1
      %s364 = scalar_select %p363, %s23, 1
      %s365 = smul.addr %s364, 8
      %s366 = scalar_lea.vmem %s1, %s365
      %p367 = pneg %p65
      %p368 = pneg %p62
      %p369 = scmp.lt.s32.totalorder %s23, 1
      %s370 = scalar_select %p369, %s23, 1
      %s371 = smul.addr %s370, 8
      %s372 = scalar_lea.vmem %s2, %s371
      %p373 = pneg %p91
      %p374 = pneg %p88
      %p375 = pneg %p112
      %p376 = pneg %p109
      %p377 = scmp.lt.s32.totalorder %s23, 1
      %s378 = scalar_select %p377, %s23, 1
      %s379 = smul.addr %s378, 8
      %s380 = scalar_lea.vmem %s4, %s379
      %p381 = pneg %p138
      %p382 = pneg %p135
      %p383 = pneg %p159
      %p384 = pneg %p156
      %p385 = pneg %p180
      %p386 = pneg %p177
      %p387 = pneg %p201
      %p388 = pneg %p198
      %p389 = pneg %p222
      %p390 = pneg %p219
      %p391 = pneg %p243
      %p392 = pneg %p240
      %p393 = pneg %p264
      %p394 = pneg %p261
      %p395 = pneg %p290
      %p396 = pneg %p287
      %p397 = scmp.lt.s32.totalorder %s23, 1
      %s398 = scalar_select %p397, %s23, 1
      %s399 = smul.addr %s398, 8
      %s400 = scalar_lea.vmem %s11, %s399
      %p401 = scmp.lt.s32.totalorder %s23, 1
      %s402 = scalar_select %p401, %s23, 1
      %s403 = smul.addr %s402, 8
      %s404 = scalar_lea.vmem %s1, %s403
      %p405 = scmp.lt.s32.totalorder %s23, 1
      %s406 = scalar_select %p405, %s23, 1
      %s407 = smul.addr %s406, 8
      %s408 = scalar_lea.vmem %s2, %s407
      %p409 = scmp.lt.s32.totalorder %s23, 1
      %s410 = scalar_select %p409, %s23, 1
      %s411 = smul.addr %s410, 8
      %s412 = scalar_lea.vmem %s4, %s411
      %p413 = scmp.lt.s32.totalorder %s23, 1
      %s414 = scalar_select %p413, %s23, 1
      %s415 = smul.addr %s414, 8
      %s416 = scalar_lea.vmem %s11, %s415
      %v417 = vld [vmem:[%s404] sm:$0xff]
      %v418 = vld [vmem:[%s3] sm:$0xff]
      %v419 = vld [vmem:[%s3 + $0x8] sm:$0xff]
      %s420 = sld [smem:[#allocation2]]
      %v421 = vld [vmem:[%s408] sm:$0xff]
      %v422 = vstv %s420
      %v423 = vmul.f32 %v422, %v421
      %v424 = vld [vmem:[%s412] sm:$0xff]
      %426 = vset.pattern.permute.xlu0 0
      %427 = vperm.xlu0 %426, %v423
      %v428 = vpop.permute.xlu0 %427
      %v430 = vmul.f32 %v428, %v424
      %vm431 = vcmask 130048
      %v433 = vsel %vm431, %v417, 0
      %435 = vmatprep.subr.mxu0 0.0
      %436 = vmatpush1.msra.mxu0 %v418
      %437 = vmatprep.subr.mxu0 0.0
      %438 = vmatpush1.msra.mxu0 %v419
      %439 = vmatprep.subr.mxu0 0.0
      %440 = vmatpush1.msra.mxu0 0.0
      %441 = vmatprep.subr.mxu0 0.0
      %442 = vmatpush1.msra.mxu0 0.0
      %443 = vmatprep.subr.mxu0 0.0
      %444 = vmatpush1.msra.mxu0 0.0
      %445 = vmatprep.subr.mxu0 0.0
      %446 = vmatpush1.msra.mxu0 0.0
      %447 = vmatprep.subr.mxu0 0.0
      %448 = vmatpush1.msra.mxu0 0.0
      %449 = vmatprep.subr.mxu0 0.0
      %450 = vmatpush1.msra.mxu0 0.0
      %451 = vmatprep.subr.mxu0 0.0
      %452 = vmatpush1.msra.mxu0 0.0
      %453 = vmatprep.subr.mxu0 0.0
      %454 = vmatpush1.msra.mxu0 0.0
      %455 = vmatprep.subr.mxu0 0.0
      %456 = vmatpush1.msra.mxu0 0.0
      %457 = vmatprep.subr.mxu0 0.0
      %458 = vmatpush1.msra.mxu0 0.0
      %459 = vmatprep.subr.mxu0 0.0
      %460 = vmatpush1.msra.mxu0 0.0
      %461 = vmatprep.subr.mxu0 0.0
      %462 = vmatpush1.msra.mxu0 0.0
      %463 = vmatprep.subr.mxu0 0.0
      %464 = vmatpush1.msra.mxu0 0.0
      %465 = vmatprep.subr.mxu0 0.0
      %466 = vmatpush1.msra.mxu0 0.0
      %467 = vmatprep.subr.mxu0 0.0
      %468 = vmatpush1.msra.mxu0 0.0
      %469 = vmatprep.subr.mxu0 0.0
      %470 = vmatpush1.msra.mxu0 0.0
      %471 = vmatprep.subr.mxu0 0.0
      %472 = vmatpush1.msra.mxu0 0.0
      %473 = vmatprep.subr.mxu0 0.0
      %474 = vmatpush1.msra.mxu0 0.0
      %475 = vmatprep.subr.mxu0 0.0
      %476 = vmatpush1.msra.mxu0 0.0
      %477 = vmatprep.subr.mxu0 0.0
      %478 = vmatpush1.msra.mxu0 0.0
      %479 = vmatprep.subr.mxu0 0.0
      %480 = vmatpush1.msra.mxu0 0.0
      %481 = vmatprep.subr.mxu0 0.0
      %482 = vmatpush1.msra.mxu0 0.0
      %483 = vmatprep.subr.mxu0 0.0
      %484 = vmatpush1.msra.mxu0 0.0
      %485 = vmatprep.subr.mxu0 0.0
      %486 = vmatpush1.msra.mxu0 0.0
      %487 = vmatprep.subr.mxu0 0.0
      %488 = vmatpush1.msra.mxu0 0.0
      %489 = vmatprep.subr.mxu0 0.0
      %490 = vmatpush1.msra.mxu0 0.0
      %491 = vmatprep.subr.mxu0 0.0
      %492 = vmatpush1.msra.mxu0 0.0
      %493 = vmatprep.subr.mxu0 0.0
      %494 = vmatpush1.msra.mxu0 0.0
      %495 = vmatprep.subr.mxu0 0.0
      %496 = vmatpush1.msra.mxu0 0.0
      %497 = vmatprep.subr.mxu0 0.0
      %498 = vmatpush1.msra.mxu0 0.0
      %499 = vmatprep.mubr.f32.mxu0 0.0
      %500 = vmatmul.mubr.f32.gmra.mrb[0].mxu0 %v433
      %v501 = vpop.f32.mrb[0].mxu0
      %v502 = vadd.f32 %v430, %v501
      %v503 = vpop.f32.mrb[0].mxu0
      %504 = vdwg.mxu0
      %v505 = vld [vmem:[%s5] sm:$0xff]
      %v506 = vld [vmem:[%s5 + $0x8] sm:$0xff]
      %v507 = vld [vmem:[%s5 + $0x10] sm:$0xff]
      %v508 = vld [vmem:[%s5 + $0x18] sm:$0xff]
      %v509 = vld [vmem:[%s5 + $0x20] sm:$0xff]
      %v510 = vld [vmem:[%s5 + $0x28] sm:$0xff]
      %v511 = vld [vmem:[%s5 + $0x30] sm:$0xff]
      %v512 = vld [vmem:[%s5 + $0x38] sm:$0xff]
      %v513 = vld [vmem:[%s5 + $0x40] sm:$0xff]
      %v514 = vld [vmem:[%s5 + $0x48] sm:$0xff]
      %v515 = vld [vmem:[%s5 + $0x50] sm:$0xff]
      %v516 = vld [vmem:[%s5 + $0x58] sm:$0xff]
      %v517 = vld [vmem:[%s5 + $0x60] sm:$0xff]
      %v518 = vld [vmem:[%s5 + $0x68] sm:$0xff]
      %v519 = vld [vmem:[%s5 + $0x70] sm:$0xff]
      %v520 = vld [vmem:[%s5 + $0x78] sm:$0xff]
      %v521 = vld [vmem:[%s6] sm:$0x1]
      %v523 = vlaneseq
      %v524 = vshrl.u32 %v523, 7
      %v525 = vsub.s32 0, %v524
      %v526 = vrot.slane %v521, %v525
      %528 = vmatprep.subr.mxu0 0.0
      %529 = vmatpush1.msra.mxu0 %v505
      %530 = vmatprep.subr.mxu0 0.0
      %531 = vmatpush1.msra.mxu0 %v506
      %532 = vmatprep.subr.mxu0 0.0
      %533 = vmatpush1.msra.mxu0 %v507
      %534 = vmatprep.subr.mxu0 0.0
      %535 = vmatpush1.msra.mxu0 %v508
      %536 = vmatprep.subr.mxu0 0.0
      %537 = vmatpush1.msra.mxu0 %v509
      %538 = vmatprep.subr.mxu0 0.0
      %539 = vmatpush1.msra.mxu0 %v510
      %540 = vmatprep.subr.mxu0 0.0
      %541 = vmatpush1.msra.mxu0 %v511
      %542 = vmatprep.subr.mxu0 0.0
      %543 = vmatpush1.msra.mxu0 %v512
      %544 = vmatprep.subr.mxu0 0.0
      %545 = vmatpush1.msra.mxu0 %v513
      %546 = vmatprep.subr.mxu0 0.0
      %547 = vmatpush1.msra.mxu0 %v514
      %548 = vmatprep.subr.mxu0 0.0
      %549 = vmatpush1.msra.mxu0 %v515
      %550 = vmatprep.subr.mxu0 0.0
      %551 = vmatpush1.msra.mxu0 %v516
      %552 = vmatprep.subr.mxu0 0.0
      %553 = vmatpush1.msra.mxu0 %v517
      %554 = vmatprep.subr.mxu0 0.0
      %555 = vmatpush1.msra.mxu0 %v518
      %556 = vmatprep.subr.mxu0 0.0
      %557 = vmatpush1.msra.mxu0 %v519
      %558 = vmatprep.subr.mxu0 0.0
      %559 = vmatpush1.msra.mxu0 %v520
      %560 = vmatprep.subr.mxu0 0.0
      %561 = vmatpush1.msra.mxu0 0.0
      %562 = vmatprep.subr.mxu0 0.0
      %563 = vmatpush1.msra.mxu0 0.0
      %564 = vmatprep.subr.mxu0 0.0
      %565 = vmatpush1.msra.mxu0 0.0
      %566 = vmatprep.subr.mxu0 0.0
      %567 = vmatpush1.msra.mxu0 0.0
      %568 = vmatprep.subr.mxu0 0.0
      %569 = vmatpush1.msra.mxu0 0.0
      %570 = vmatprep.subr.mxu0 0.0
      %571 = vmatpush1.msra.mxu0 0.0
      %572 = vmatprep.subr.mxu0 0.0
      %573 = vmatpush1.msra.mxu0 0.0
      %574 = vmatprep.subr.mxu0 0.0
      %575 = vmatpush1.msra.mxu0 0.0
      %576 = vmatprep.subr.mxu0 0.0
      %577 = vmatpush1.msra.mxu0 0.0
      %578 = vmatprep.subr.mxu0 0.0
      %579 = vmatpush1.msra.mxu0 0.0
      %580 = vmatprep.subr.mxu0 0.0
      %581 = vmatpush1.msra.mxu0 0.0
      %582 = vmatprep.subr.mxu0 0.0
      %583 = vmatpush1.msra.mxu0 0.0
      %584 = vmatprep.subr.mxu0 0.0
      %585 = vmatpush1.msra.mxu0 0.0
      %586 = vmatprep.subr.mxu0 0.0
      %587 = vmatpush1.msra.mxu0 0.0
      %588 = vmatprep.subr.mxu0 0.0
      %589 = vmatpush1.msra.mxu0 0.0
      %590 = vmatprep.subr.mxu0 0.0
      %591 = vmatpush1.msra.mxu0 0.0
      %592 = vmatprep.mubr.f32.mxu0 0.0
      %593 = vmatmul.mubr.f32.gmra.mrb[0].mxu0 %v502
      %v594 = vpop.f32.mrb[0].mxu0
      %v595 = vadd.f32 %v526, %v594
      %v596 = vpop.f32.mrb[0].mxu0
      %597 = vdwg.mxu0
      %v598 = vmax.f32 %v595, 0.0
      %v599 = vld [vmem:[%s7] sm:$0xff]
      %v600 = vld [vmem:[%s7 + $0x8] sm:$0xff]
      %v601 = vld [vmem:[%s7 + $0x10] sm:$0xff]
      %v602 = vld [vmem:[%s7 + $0x18] sm:$0xff]
      %v603 = vld [vmem:[%s7 + $0x20] sm:$0xff]
      %v604 = vld [vmem:[%s7 + $0x28] sm:$0xff]
      %v605 = vld [vmem:[%s7 + $0x30] sm:$0xff]
      %v606 = vld [vmem:[%s7 + $0x38] sm:$0xff]
      %v607 = vld [vmem:[%s7 + $0x40] sm:$0xff]
      %v608 = vld [vmem:[%s7 + $0x48] sm:$0xff]
      %v609 = vld [vmem:[%s7 + $0x50] sm:$0xff]
      %v610 = vld [vmem:[%s7 + $0x58] sm:$0xff]
      %v611 = vld [vmem:[%s7 + $0x60] sm:$0xff]
      %v612 = vld [vmem:[%s7 + $0x68] sm:$0xff]
      %v613 = vld [vmem:[%s7 + $0x70] sm:$0xff]
      %v614 = vld [vmem:[%s7 + $0x78] sm:$0xff]
      %v615 = vld [vmem:[%s8] sm:$0x1]
      %v617 = vlaneseq
      %v618 = vshrl.u32 %v617, 7
      %v619 = vsub.s32 0, %v618
      %v620 = vrot.slane %v615, %v619
      %622 = vmatprep.subr.mxu0 0.0
      %623 = vmatpush1.msra.mxu0 %v599
      %624 = vmatprep.subr.mxu0 0.0
      %625 = vmatpush1.msra.mxu0 %v600
      %626 = vmatprep.subr.mxu0 0.0
      %627 = vmatpush1.msra.mxu0 %v601
      %628 = vmatprep.subr.mxu0 0.0
      %629 = vmatpush1.msra.mxu0 %v602
      %630 = vmatprep.subr.mxu0 0.0
      %631 = vmatpush1.msra.mxu0 %v603
      %632 = vmatprep.subr.mxu0 0.0
      %633 = vmatpush1.msra.mxu0 %v604
      %634 = vmatprep.subr.mxu0 0.0
      %635 = vmatpush1.msra.mxu0 %v605
      %636 = vmatprep.subr.mxu0 0.0
      %637 = vmatpush1.msra.mxu0 %v606
      %638 = vmatprep.subr.mxu0 0.0
      %639 = vmatpush1.msra.mxu0 %v607
      %640 = vmatprep.subr.mxu0 0.0
      %641 = vmatpush1.msra.mxu0 %v608
      %642 = vmatprep.subr.mxu0 0.0
      %643 = vmatpush1.msra.mxu0 %v609
      %644 = vmatprep.subr.mxu0 0.0
      %645 = vmatpush1.msra.mxu0 %v610
      %646 = vmatprep.subr.mxu0 0.0
      %647 = vmatpush1.msra.mxu0 %v611
      %648 = vmatprep.subr.mxu0 0.0
      %649 = vmatpush1.msra.mxu0 %v612
      %650 = vmatprep.subr.mxu0 0.0
      %651 = vmatpush1.msra.mxu0 %v613
      %652 = vmatprep.subr.mxu0 0.0
      %653 = vmatpush1.msra.mxu0 %v614
      %654 = vmatprep.subr.mxu0 0.0
      %655 = vmatpush1.msra.mxu0 0.0
      %656 = vmatprep.subr.mxu0 0.0
      %657 = vmatpush1.msra.mxu0 0.0
      %658 = vmatprep.subr.mxu0 0.0
      %659 = vmatpush1.msra.mxu0 0.0
      %660 = vmatprep.subr.mxu0 0.0
      %661 = vmatpush1.msra.mxu0 0.0
      %662 = vmatprep.subr.mxu0 0.0
      %663 = vmatpush1.msra.mxu0 0.0
      %664 = vmatprep.subr.mxu0 0.0
      %665 = vmatpush1.msra.mxu0 0.0
      %666 = vmatprep.subr.mxu0 0.0
      %667 = vmatpush1.msra.mxu0 0.0
      %668 = vmatprep.subr.mxu0 0.0
      %669 = vmatpush1.msra.mxu0 0.0
      %670 = vmatprep.subr.mxu0 0.0
      %671 = vmatpush1.msra.mxu0 0.0
      %672 = vmatprep.subr.mxu0 0.0
      %673 = vmatpush1.msra.mxu0 0.0
      %674 = vmatprep.subr.mxu0 0.0
      %675 = vmatpush1.msra.mxu0 0.0
      %676 = vmatprep.subr.mxu0 0.0
      %677 = vmatpush1.msra.mxu0 0.0
      %678 = vmatprep.subr.mxu0 0.0
      %679 = vmatpush1.msra.mxu0 0.0
      %680 = vmatprep.subr.mxu0 0.0
      %681 = vmatpush1.msra.mxu0 0.0
      %682 = vmatprep.subr.mxu0 0.0
      %683 = vmatpush1.msra.mxu0 0.0
      %684 = vmatprep.subr.mxu0 0.0
      %685 = vmatpush1.msra.mxu0 0.0
      %686 = vmatprep.mubr.f32.mxu0 0.0
      %687 = vmatmul.mubr.f32.gmra.mrb[0].mxu0 %v598
      %v688 = vpop.f32.mrb[0].mxu0
      %v689 = vadd.f32 %v620, %v688
      %v690 = vpop.f32.mrb[0].mxu0
      %691 = vdwg.mxu0
      %v692 = vmax.f32 %v689, 0.0
      %v693 = vld [vmem:[%s9] sm:$0xff]
      %v694 = vld [vmem:[%s9 + $0x8] sm:$0xff]
      %v695 = vld [vmem:[%s9 + $0x10] sm:$0xff]
      %v696 = vld [vmem:[%s9 + $0x18] sm:$0xff]
      %v697 = vld [vmem:[%s9 + $0x20] sm:$0xff]
      %v698 = vld [vmem:[%s9 + $0x28] sm:$0xff]
      %v699 = vld [vmem:[%s9 + $0x30] sm:$0xff]
      %v700 = vld [vmem:[%s9 + $0x38] sm:$0xff]
      %v701 = vld [vmem:[%s9 + $0x40] sm:$0xff]
      %v702 = vld [vmem:[%s9 + $0x48] sm:$0xff]
      %v703 = vld [vmem:[%s9 + $0x50] sm:$0xff]
      %v704 = vld [vmem:[%s9 + $0x58] sm:$0xff]
      %v705 = vld [vmem:[%s9 + $0x60] sm:$0xff]
      %v706 = vld [vmem:[%s9 + $0x68] sm:$0xff]
      %v707 = vld [vmem:[%s9 + $0x70] sm:$0xff]
      %v708 = vld [vmem:[%s9 + $0x78] sm:$0xff]
      %v709 = vld [vmem:[%s10] sm:$0x1]
      %v711 = vlaneseq
      %v712 = vshrl.u32 %v711, 7
      %v713 = vsub.s32 0, %v712
      %v714 = vrot.slane %v709, %v713
      %716 = vmatprep.subr.mxu0 0.0
      %717 = vmatpush1.msra.mxu0 %v693
      %718 = vmatprep.subr.mxu0 0.0
      %719 = vmatpush1.msra.mxu0 %v694
      %720 = vmatprep.subr.mxu0 0.0
      %721 = vmatpush1.msra.mxu0 %v695
      %722 = vmatprep.subr.mxu0 0.0
      %723 = vmatpush1.msra.mxu0 %v696
      %724 = vmatprep.subr.mxu0 0.0
      %725 = vmatpush1.msra.mxu0 %v697
      %726 = vmatprep.subr.mxu0 0.0
      %727 = vmatpush1.msra.mxu0 %v698
      %728 = vmatprep.subr.mxu0 0.0
      %729 = vmatpush1.msra.mxu0 %v699
      %730 = vmatprep.subr.mxu0 0.0
      %731 = vmatpush1.msra.mxu0 %v700
      %732 = vmatprep.subr.mxu0 0.0
      %733 = vmatpush1.msra.mxu0 %v701
      %734 = vmatprep.subr.mxu0 0.0
      %735 = vmatpush1.msra.mxu0 %v702
      %736 = vmatprep.subr.mxu0 0.0
      %737 = vmatpush1.msra.mxu0 %v703
      %738 = vmatprep.subr.mxu0 0.0
      %739 = vmatpush1.msra.mxu0 %v704
      %740 = vmatprep.subr.mxu0 0.0
      %741 = vmatpush1.msra.mxu0 %v705
      %742 = vmatprep.subr.mxu0 0.0
      %743 = vmatpush1.msra.mxu0 %v706
      %744 = vmatprep.subr.mxu0 0.0
      %745 = vmatpush1.msra.mxu0 %v707
      %746 = vmatprep.subr.mxu0 0.0
      %747 = vmatpush1.msra.mxu0 %v708
      %748 = vmatprep.subr.mxu0 0.0
      %749 = vmatpush1.msra.mxu0 0.0
      %750 = vmatprep.subr.mxu0 0.0
      %751 = vmatpush1.msra.mxu0 0.0
      %752 = vmatprep.subr.mxu0 0.0
      %753 = vmatpush1.msra.mxu0 0.0
      %754 = vmatprep.subr.mxu0 0.0
      %755 = vmatpush1.msra.mxu0 0.0
      %756 = vmatprep.subr.mxu0 0.0
      %757 = vmatpush1.msra.mxu0 0.0
      %758 = vmatprep.subr.mxu0 0.0
      %759 = vmatpush1.msra.mxu0 0.0
      %760 = vmatprep.subr.mxu0 0.0
      %761 = vmatpush1.msra.mxu0 0.0
      %762 = vmatprep.subr.mxu0 0.0
      %763 = vmatpush1.msra.mxu0 0.0
      %764 = vmatprep.subr.mxu0 0.0
      %765 = vmatpush1.msra.mxu0 0.0
      %766 = vmatprep.subr.mxu0 0.0
      %767 = vmatpush1.msra.mxu0 0.0
      %768 = vmatprep.subr.mxu0 0.0
      %769 = vmatpush1.msra.mxu0 0.0
      %770 = vmatprep.subr.mxu0 0.0
      %771 = vmatpush1.msra.mxu0 0.0
      %772 = vmatprep.subr.mxu0 0.0
      %773 = vmatpush1.msra.mxu0 0.0
      %774 = vmatprep.subr.mxu0 0.0
      %775 = vmatpush1.msra.mxu0 0.0
      %776 = vmatprep.subr.mxu0 0.0
      %777 = vmatpush1.msra.mxu0 0.0
      %778 = vmatprep.subr.mxu0 0.0
      %779 = vmatpush1.msra.mxu0 0.0
      %780 = vmatprep.mubr.f32.mxu0 0.0
      %781 = vmatmul.mubr.f32.gmra.mrb[0].mxu0 %v692
      %v782 = vpop.f32.mrb[0].mxu0
      %v783 = vadd.f32 %v714, %v782
      %v784 = vpop.f32.mrb[0].mxu0
      %785 = vdwg.mxu0
      %786 = vst [vmem:[%s416] sm:$0xff] %v783
      %p787 = scmp.lt.s32.totalorder %s23, 1
      %s788 = scalar_select %p787, %s23, 1
      %s789 = smul.addr %s788, 8
      %s790 = scalar_lea.vmem %s11, %s789
      // Predicated region
      $region65: #{gin_forward.1} parent=63 // pred_check
        %p791 = pneg %p287
      $region66: #{gin_forward.1} parent=63 // pred_check_branch
        %793 = sbr.rel (%p791) target = $region68
      $region67: #{gin_forward.1} parent=63 // pred_region
        _
      $region68: #{gin_forward.1} parent=63 // pred_fallthru
        _
    $region64: #{gin_forward.1} parent=5 // pred_fallthru
      _
    %p794 = scmp.le.s32.totalorder 2, %s18
    // Predicated region
    $region69: #{gin_forward.1} parent=5 // pred_check
      %p795 = pneg %p794
    $region70: #{gin_forward.1} parent=5 // pred_check_branch
      %797 = sbr.rel (%p795) target = $region72
    $region71: #{gin_forward.1} parent=5 // pred_region
      %s798 = ssub.s32 %s18, 2
      // Predicated region
      $region73: #{gin_forward.1} parent=71 // pred_check
        %p799 = pneg %p293
      $region74: #{gin_forward.1} parent=71 // pred_check_branch
        %801 = sbr.rel (%p799) target = $region76
      $region75: #{gin_forward.1} parent=71 // pred_region
        %p802 = scmp.lt.s32.totalorder %s24, 1
        %s803 = scalar_select %p802, %s24, 1
        %s804 = smul.addr %s803, 8
        %s805 = scalar_lea.vmem %s11, %s804
      $region76: #{gin_forward.1} parent=71 // pred_fallthru
        _
    $region72: #{gin_forward.1} parent=5 // pred_fallthru
      _
  $region6: #{gin_forward.1} parent=0 // loop_footer
    %s22 = sadd.s32 1, %s18
  $region7: #{gin_forward.1} parent=0 // loop_footer_branch
    %17 = sbr.rel target = $region3
  $region8: #{gin_forward.1} parent=0 // loop_exit
    _

</llo_original>
